<compile_context>
chip_gen: v5e
topology: v5e:2x2
jax: 0.10.0
libtpu: 0.0.40
codegen_flags: <defaults>
</compile_context>

<pallas_src>
import math

import jax
import jax.numpy as jnp
from jax.experimental import pallas as pl
from jax.experimental.pallas import tpu as pltpu


def _self_attention_kernel(xq_ref, xkv_ref, wq_ref, wk_ref, wv_ref, wo_ref,
                           out_ref, attn_ref, k_scr, v_scr):
    """Grid = (batch tiles, query tiles).

    xq_ref : (bt, tq, D)  query rows of this step
    xkv_ref: (bt, S, D)   full sequence for K/V (block index constant in q)
    wq_ref : (D, D)       Wq^T * (1/sqrt(D))   (pre-transposed, pre-scaled)
    wk_ref, wv_ref, wo_ref: (D, D) pre-transposed weights
    k_scr, v_scr: (bt, S, D) VMEM scratch holding K/V for the current batch tile
    """
    bt, tq, D = xq_ref.shape
    S = xkv_ref.shape[1]
    qi = pl.program_id(1)
    in_dtype = xq_ref.dtype

    # K/V are shared by every query tile of this batch block: project once per
    # batch block (q-tile 0) into VMEM scratch, stored in the input dtype so
    # downstream MXU matmuls stay on the fast path (accumulation is f32).
    @pl.when(qi == 0)
    def _():
        xkv = xkv_ref[...].reshape(bt * S, D)
        k_scr[...] = jnp.dot(
            xkv, wk_ref[...], preferred_element_type=jnp.float32
        ).astype(in_dtype).reshape(bt, S, D)
        v_scr[...] = jnp.dot(
            xkv, wv_ref[...], preferred_element_type=jnp.float32
        ).astype(in_dtype).reshape(bt, S, D)

    # Q projection for this query tile; 1/sqrt(D) already folded into wq_ref.
    xq = xq_ref[...]
    q = jnp.dot(
        xq.reshape(bt * tq, D), wq_ref[...], preferred_element_type=jnp.float32
    ).astype(in_dtype).reshape(bt, tq, D)

    k = k_scr[...]
    v = v_scr[...]

    # scores = (q / sqrt(D)) k^T — contract last dims, no explicit transpose.
    scores = jnp.einsum("bqd,bkd->bqk", q, k,
                        preferred_element_type=jnp.float32)    # (bt, tq, S) f32

    # Numerically stable, *exact* softmax (module semantics: rows sum to 1).
    m = jnp.max(scores, axis=-1, keepdims=True)
    e = jnp.exp(scores - m)
    weights = e / jnp.sum(e, axis=-1, keepdims=True)

    # context = tanh(weights @ V) @ Wout^T — MXU operands back in input dtype.
    ctx = jnp.einsum("bqk,bkd->bqd", weights.astype(in_dtype), v,
                     preferred_element_type=jnp.float32)
    ctx = jnp.tanh(ctx).astype(in_dtype)
    out = jnp.dot(
        ctx.reshape(bt * tq, D), wo_ref[...], preferred_element_type=jnp.float32
    ).reshape(bt, tq, D)

    out_ref[...] = out.astype(out_ref.dtype)
    attn_ref[...] = weights.astype(attn_ref.dtype)


def _vmem_estimate(bt, tq, S, D, in_bytes, attn_bytes):
    """Rough per-step VMEM footprint (bytes) for the chosen tiling."""
    dbl = 2  # BlockSpec pipeline double-buffering
    io_blocks = dbl * (bt * tq * D * in_bytes        # x (query view)
                       + bt * S * D * in_bytes       # x (K/V view)
                       + bt * tq * D * in_bytes      # context output block
                       + bt * tq * S * attn_bytes)   # attention-weights block
    weight_blocks = dbl * 4 * D * D * in_bytes       # wq/wk/wv/wo (double-buffered
                                                     # even with constant index_map)
    kv_scratch = 2 * bt * S * D * in_bytes
    intermediates = 3 * bt * tq * S * 4 + 3 * bt * tq * D * 4   # f32 scores/e/w, q/ctx
    return io_blocks + weight_blocks + kv_scratch + intermediates


def _pick_tiles(B, S, D, in_bytes, attn_bytes,
                vmem_budget=48 << 20, target_rows=2048):
    """Pick (batch tile, query tile) against a v7x-safe (64 MiB) VMEM budget."""
    # Query-tile candidates: sublane-aligned (multiple of 8) divisors of S, or
    # the whole sequence; largest first.
    tq_cands = [t for t in range(S, 0, -1)
                if S % t == 0 and (t % 8 == 0 or t == S)]
    # Batch-tile candidates: divisors of B leaving >= 2 grid steps on the batch
    # axis so v7x's second TensorCore gets work (v5e/v6e: single TC, harmless).
    bt_cands = [b for b in range(B, 0, -1)
                if B % b == 0 and (B // b >= 2 or B == 1)]

    def fits(b, t):
        return _vmem_estimate(b, t, S, D, in_bytes, attn_bytes) <= vmem_budget

    # Largest query tile that fits with the minimal batch tile: bounds the
    # tq*S score/softmax intermediates instead of the full S*S slab.
    tq = next((t for t in tq_cands if fits(1, t)), tq_cands[-1])
    # Grow the batch tile toward ~target_rows rows/step (amortizes ~0.35us/step
    # overhead; bigger tiles measured up to ~86% of HBM roofline) in budget.
    bt = 1
    for b in bt_cands:
        if b * tq <= max(target_rows, tq) and fits(b, tq):
            bt = b
            break
    return bt, tq


def parametric_self_attention(context, wq, wk, wv, wo):
    """context: (B, S, D). wq/wk/wv/wo: (D, D) in torch nn.Linear (out, in) layout.

    Returns (context_, attention_weights) like the PyTorch module.
    """
    B, S, D = context.shape
    dtype = context.dtype
    scale = 1.0 / math.sqrt(D)

    # Wrapper-side layout plumbing (free at trace time): pre-transpose all
    # weights, fold the 1/sqrt(D) score scale into Wq^T, and keep weights in
    # the input dtype so every MXU matmul runs on the fast path.
    wq_t = (wq.T * jnp.asarray(scale, wq.dtype)).astype(dtype)
    wk_t = wk.T.astype(dtype)
    wv_t = wv.T.astype(dtype)
    wo_t = wo.T.astype(dtype)

    attn_dtype = dtype  # emit weights in input dtype (halves HBM writes for bf16)
    in_bytes = jnp.dtype(dtype).itemsize
    attn_bytes = jnp.dtype(attn_dtype).itemsize

    bt, tq = _pick_tiles(B, S, D, in_bytes, attn_bytes)
    grid = (B // bt, S // tq)

    est = _vmem_estimate(bt, tq, S, D, in_bytes, attn_bytes)
    vmem_limit = int(min(64 << 20, max(32 << 20, int(est * 1.25) + (1 << 20))))

    out_shapes = (
        jax.ShapeDtypeStruct((B, S, D), dtype),        # context_
        jax.ShapeDtypeStruct((B, S, S), attn_dtype),   # attention_weights
    )
    # NOTE: the module API returns the full (q, S) attention rows, so the dense
    # softmax materialization per query tile is required; only the tq*S tile is
    # ever live in VMEM thanks to the query-tile grid axis.
    # NOTE: for very large D the untiled (D,D) weight blocks would need a
    # contraction-axis grid dimension; not needed at these sizes.
    return pl.pallas_call(
        _self_attention_kernel,
        out_shape=out_shapes,
        grid_spec=pltpu.PrefetchScalarGridSpec(
            num_scalar_prefetch=0,
            grid=grid,
            in_specs=[
                pl.BlockSpec((bt, tq, D), lambda b, q: (b, q, 0)),  # x for Q
                pl.BlockSpec((bt, S, D), lambda b, q: (b, 0, 0)),   # x for K/V
                pl.BlockSpec((D, D), lambda b, q: (0, 0)),          # Wq^T/sqrt(D)
                pl.BlockSpec((D, D), lambda b, q: (0, 0)),          # Wk^T
                pl.BlockSpec((D, D), lambda b, q: (0, 0)),          # Wv^T
                pl.BlockSpec((D, D), lambda b, q: (0, 0)),          # Wout^T
            ],
            out_specs=(
                pl.BlockSpec((bt, tq, D), lambda b, q: (b, q, 0)),
                pl.BlockSpec((bt, tq, S), lambda b, q: (b, q, 0)),
            ),
            scratch_shapes=[
                pltpu.VMEM((bt, S, D), dtype),   # K for current batch tile
                pltpu.VMEM((bt, S, D), dtype),   # V for current batch tile
            ],
        ),
        compiler_params=pltpu.CompilerParams(
            dimension_semantics=("parallel", "arbitrary"),
            vmem_limit_bytes=vmem_limit),
    )(context, context, wq_t, wk_t, wv_t, wo_t)


def _reference(context, wq, wk, wv, wo):
    x = context.astype(jnp.float32)
    q = x @ wq.T
    k = x @ wk.T
    v = x @ wv.T
    s = jnp.einsum("bqd,bkd->bqk", q, k) / math.sqrt(x.shape[-1])
    w = jax.nn.softmax(s, axis=-1)
    ctx = jnp.tanh(jnp.einsum("bqk,bkd->bqd", w, v))
    out = ctx @ wo.T
    return out, w


if __name__ == "__main__":
    B, S, D = 2, 8, 32

    root = jax.random.PRNGKey(0)
    kx, kq, kk, kv, ko = jax.random.split(root, 5)

    # Deterministic parameter init (mimics nn.Linear kaiming-uniform bound).
    bound = 1.0 / math.sqrt(D)
    wq = jax.random.uniform(kq, (D, D), jnp.float32, -bound, bound)
    wk = jax.random.uniform(kk, (D, D), jnp.float32, -bound, bound)
    wv = jax.random.uniform(kv, (D, D), jnp.float32, -bound, bound)
    wo = jax.random.uniform(ko, (D, D), jnp.float32, -bound, bound)

    context = jax.random.normal(kx, (B, S, D), jnp.float32)

    out, attn = parametric_self_attention(context, wq, wk, wv, wo)
    out = jax.block_until_ready(out)
    attn = jax.block_until_ready(attn)

    ref_out, ref_attn = _reference(context, wq, wk, wv, wo)
    assert out.shape == (B, S, D) and attn.shape == (B, S, S)
    assert jnp.allclose(attn, ref_attn, atol=1e-3, rtol=1e-3)
    assert jnp.allclose(out, ref_out, atol=2e-3, rtol=2e-3)
    # Exact softmax normalization: attention rows sum to 1.
    assert jnp.allclose(jnp.sum(attn.astype(jnp.float32), axis=-1), 1.0, atol=1e-3)

    print("KERNEL_OK")
</pallas_src>

<mosaic_0001>
module attributes {stable_mosaic.version = 11 : i64} {
  func.func @_self_attention_kernel(%arg0: i32, %arg1: i32, %arg2: memref<1x8x32xf32, #tpu.memory_space<vmem>>, %arg3: memref<1x8x32xf32, #tpu.memory_space<vmem>>, %arg4: memref<32x32xf32, #tpu.memory_space<vmem>>, %arg5: memref<32x32xf32, #tpu.memory_space<vmem>>, %arg6: memref<32x32xf32, #tpu.memory_space<vmem>>, %arg7: memref<32x32xf32, #tpu.memory_space<vmem>>, %arg8: memref<1x8x32xf32, #tpu.memory_space<vmem>>, %arg9: memref<1x8x8xf32, #tpu.memory_space<vmem>>, %arg10: memref<1x8x32xf32, #tpu.memory_space<vmem>>, %arg11: memref<1x8x32xf32, #tpu.memory_space<vmem>>) attributes {dimension_semantics = [#tpu.dimension_semantics<parallel>, #tpu.dimension_semantics<arbitrary>], iteration_bounds = array<i64: 2, 1>, scalar_prefetch = 0 : i64, scratch_operands = 2 : i64, tpu.core_type = #tpu.core_type<tc>, window_params = [{transform_indices = @transform_0, window_bounds = array<i64: 1, 8, 32>}, {transform_indices = @transform_1, window_bounds = array<i64: 1, 8, 32>}, {pipeline_mode = #tpu.pipeline_mode<synchronous>, transform_indices = @transform_2, window_bounds = array<i64: 32, 32>}, {pipeline_mode = #tpu.pipeline_mode<synchronous>, transform_indices = @transform_3, window_bounds = array<i64: 32, 32>}, {pipeline_mode = #tpu.pipeline_mode<synchronous>, transform_indices = @transform_4, window_bounds = array<i64: 32, 32>}, {pipeline_mode = #tpu.pipeline_mode<synchronous>, transform_indices = @transform_5, window_bounds = array<i64: 32, 32>}, {transform_indices = @transform_6, window_bounds = array<i64: 1, 8, 32>}, {transform_indices = @transform_7, window_bounds = array<i64: 1, 8, 8>}]} {
    %c0_i32 = arith.constant 0 : i32
    %0 = arith.cmpi eq, %arg1, %c0_i32 : i32
    %1 = arith.extui %0 : i1 to i32
    %c0_i32_0 = arith.constant 0 : i32
    %2 = arith.cmpi ne, %1, %c0_i32_0 : i32
    scf.if %2 {
      %c0_24 = arith.constant 0 : index
      %c0_25 = arith.constant 0 : index
      %c0_26 = arith.constant 0 : index
      %28 = vector.load %arg3[%c0_24, %c0_25, %c0_26] : memref<1x8x32xf32, #tpu.memory_space<vmem>>, vector<1x8x32xf32>
      %29 = vector.shape_cast %28 : vector<1x8x32xf32> to vector<8x32xf32>
      %c0_27 = arith.constant 0 : index
      %c0_28 = arith.constant 0 : index
      %30 = vector.load %arg5[%c0_27, %c0_28] : memref<32x32xf32, #tpu.memory_space<vmem>>, vector<32x32xf32>
      %cst_29 = arith.constant dense<0.000000e+00> : vector<8x32xf32>
      %31 = tpu.matmul %29, %30, %cst_29 {dimension_numbers = #tpu.dot_dimension_numbers<[1], [0], [0], [1], [0, 0, 1, 1], [], []>} : vector<8x32xf32>, vector<32x32xf32>, vector<8x32xf32> -> vector<8x32xf32>
      %32 = vector.shape_cast %31 : vector<8x32xf32> to vector<1x8x32xf32>
      %c0_30 = arith.constant 0 : index
      %c0_31 = arith.constant 0 : index
      %c0_32 = arith.constant 0 : index
      %33 = vector.load %arg10[%c0_30, %c0_31, %c0_32] : memref<1x8x32xf32, #tpu.memory_space<vmem>>, vector<1x8x32xf32>
      tpu.vector_store %arg10[%c0_30, %c0_31, %c0_32], %32 {strides = array<i32>} : memref<1x8x32xf32, #tpu.memory_space<vmem>>, vector<1x8x32xf32>,
      %c0_33 = arith.constant 0 : index
      %c0_34 = arith.constant 0 : index
      %34 = vector.load %arg6[%c0_33, %c0_34] : memref<32x32xf32, #tpu.memory_space<vmem>>, vector<32x32xf32>
      %cst_35 = arith.constant dense<0.000000e+00> : vector<8x32xf32>
      %35 = tpu.matmul %29, %34, %cst_35 {dimension_numbers = #tpu.dot_dimension_numbers<[1], [0], [0], [1], [0, 0, 1, 1], [], []>} : vector<8x32xf32>, vector<32x32xf32>, vector<8x32xf32> -> vector<8x32xf32>
      %36 = vector.shape_cast %35 : vector<8x32xf32> to vector<1x8x32xf32>
      %c0_36 = arith.constant 0 : index
      %c0_37 = arith.constant 0 : index
      %c0_38 = arith.constant 0 : index
      %37 = vector.load %arg11[%c0_36, %c0_37, %c0_38] : memref<1x8x32xf32, #tpu.memory_space<vmem>>, vector<1x8x32xf32>
      tpu.vector_store %arg11[%c0_36, %c0_37, %c0_38], %36 {strides = array<i32>} : memref<1x8x32xf32, #tpu.memory_space<vmem>>, vector<1x8x32xf32>,
    } else {
    }
    %c0 = arith.constant 0 : index
    %c0_1 = arith.constant 0 : index
    %c0_2 = arith.constant 0 : index
    %3 = vector.load %arg2[%c0, %c0_1, %c0_2] : memref<1x8x32xf32, #tpu.memory_space<vmem>>, vector<1x8x32xf32>
    %4 = vector.shape_cast %3 : vector<1x8x32xf32> to vector<8x32xf32>
    %c0_3 = arith.constant 0 : index
    %c0_4 = arith.constant 0 : index
    %5 = vector.load %arg4[%c0_3, %c0_4] : memref<32x32xf32, #tpu.memory_space<vmem>>, vector<32x32xf32>
    %cst = arith.constant dense<0.000000e+00> : vector<8x32xf32>
    %6 = tpu.matmul %4, %5, %cst {dimension_numbers = #tpu.dot_dimension_numbers<[1], [0], [0], [1], [0, 0, 1, 1], [], []>} : vector<8x32xf32>, vector<32x32xf32>, vector<8x32xf32> -> vector<8x32xf32>
    %7 = vector.shape_cast %6 : vector<8x32xf32> to vector<1x8x32xf32>
    %c0_5 = arith.constant 0 : index
    %c0_6 = arith.constant 0 : index
    %c0_7 = arith.constant 0 : index
    %8 = vector.load %arg10[%c0_5, %c0_6, %c0_7] : memref<1x8x32xf32, #tpu.memory_space<vmem>>, vector<1x8x32xf32>
    %c0_8 = arith.constant 0 : index
    %c0_9 = arith.constant 0 : index
    %c0_10 = arith.constant 0 : index
    %9 = vector.load %arg11[%c0_8, %c0_9, %c0_10] : memref<1x8x32xf32, #tpu.memory_space<vmem>>, vector<1x8x32xf32>
    "tpu.trace_start"() <{level = 10 : i32, message = "bqd,bkd->bqk"}> : () -> ()
    %cst_11 = arith.constant dense<0.000000e+00> : vector<1x8x8xf32>
    %10 = tpu.matmul %7, %8, %cst_11 {dimension_numbers = #tpu.dot_dimension_numbers<[2], [2], [1], [1], [0, 0, 0, 1, 1, 1], [0], [0]>} : vector<1x8x32xf32>, vector<1x8x32xf32>, vector<1x8x8xf32> -> vector<1x8x8xf32>
    "tpu.trace_stop"() : () -> ()
    %cst_12 = arith.constant dense<0xFF800000> : vector<1x8xf32>
    %11 = vector.multi_reduction <maximumf>, %10, %cst_12 [2] : vector<1x8x8xf32> to vector<1x8xf32>
    %12 = vector.shape_cast %11 : vector<1x8xf32> to vector<1x8x1xf32>
    %13 = vector.broadcast %12 : vector<1x8x1xf32> to vector<1x8x8xf32>
    %14 = arith.subf %10, %13 : vector<1x8x8xf32>
    %15 = math.exp %14 : vector<1x8x8xf32>
    %cst_13 = arith.constant dense<0.000000e+00> : vector<1x8xf32>
    %16 = vector.multi_reduction <add>, %15, %cst_13 [2] : vector<1x8x8xf32> to vector<1x8xf32>
    %17 = vector.shape_cast %16 : vector<1x8xf32> to vector<1x8x1xf32>
    %18 = vector.broadcast %17 : vector<1x8x1xf32> to vector<1x8x8xf32>
    %19 = arith.divf %15, %18 : vector<1x8x8xf32>
    "tpu.trace_start"() <{level = 10 : i32, message = "bqk,bkd->bqd"}> : () -> ()
    %cst_14 = arith.constant dense<0.000000e+00> : vector<1x8x32xf32>
    %20 = tpu.matmul %19, %9, %cst_14 {dimension_numbers = #tpu.dot_dimension_numbers<[2], [1], [1], [2], [0, 0, 0, 1, 1, 2], [0], [0]>} : vector<1x8x8xf32>, vector<1x8x32xf32>, vector<1x8x32xf32> -> vector<1x8x32xf32>
    "tpu.trace_stop"() : () -> ()
    %21 = math.tanh %20 : vector<1x8x32xf32>
    %22 = vector.shape_cast %21 : vector<1x8x32xf32> to vector<8x32xf32>
    %c0_15 = arith.constant 0 : index
    %c0_16 = arith.constant 0 : index
    %23 = vector.load %arg7[%c0_15, %c0_16] : memref<32x32xf32, #tpu.memory_space<vmem>>, vector<32x32xf32>
    %cst_17 = arith.constant dense<0.000000e+00> : vector<8x32xf32>
    %24 = tpu.matmul %22, %23, %cst_17 {dimension_numbers = #tpu.dot_dimension_numbers<[1], [0], [0], [1], [0, 0, 1, 1], [], []>} : vector<8x32xf32>, vector<32x32xf32>, vector<8x32xf32> -> vector<8x32xf32>
    %25 = vector.shape_cast %24 : vector<8x32xf32> to vector<1x8x32xf32>
    %c0_18 = arith.constant 0 : index
    %c0_19 = arith.constant 0 : index
    %c0_20 = arith.constant 0 : index
    %26 = vector.load %arg8[%c0_18, %c0_19, %c0_20] : memref<1x8x32xf32, #tpu.memory_space<vmem>>, vector<1x8x32xf32>
    tpu.vector_store %arg8[%c0_18, %c0_19, %c0_20], %25 {strides = array<i32>} : memref<1x8x32xf32, #tpu.memory_space<vmem>>, vector<1x8x32xf32>,
    %c0_21 = arith.constant 0 : index
    %c0_22 = arith.constant 0 : index
    %c0_23 = arith.constant 0 : index
    %27 = vector.load %arg9[%c0_21, %c0_22, %c0_23] : memref<1x8x8xf32, #tpu.memory_space<vmem>>, vector<1x8x8xf32>
    tpu.vector_store %arg9[%c0_21, %c0_22, %c0_23], %19 {strides = array<i32>} : memref<1x8x8xf32, #tpu.memory_space<vmem>>, vector<1x8x8xf32>,
    return
  }
  func.func @transform_0(%arg0: i32, %arg1: i32) -> (i32, i32, i32) {
    %c0_i32 = arith.constant 0 : i32
    %c0_i32_0 = arith.constant 0 : i32
    return %arg0, %arg1, %c0_i32 : i32, i32, i32
  }
  func.func @transform_1(%arg0: i32, %arg1: i32) -> (i32, i32, i32) {
    %c0_i32 = arith.constant 0 : i32
    %c0_i32_0 = arith.constant 0 : i32
    %c0_i32_1 = arith.constant 0 : i32
    return %arg0, %c0_i32, %c0_i32_0 : i32, i32, i32
  }
  func.func @transform_2(%arg0: i32, %arg1: i32) -> (i32, i32) {
    %c0_i32 = arith.constant 0 : i32
    %c0_i32_0 = arith.constant 0 : i32
    %c0_i32_1 = arith.constant 0 : i32
    return %c0_i32, %c0_i32_0 : i32, i32
  }
  func.func @transform_3(%arg0: i32, %arg1: i32) -> (i32, i32) {
    %c0_i32 = arith.constant 0 : i32
    %c0_i32_0 = arith.constant 0 : i32
    %c0_i32_1 = arith.constant 0 : i32
    return %c0_i32, %c0_i32_0 : i32, i32
  }
  func.func @transform_4(%arg0: i32, %arg1: i32) -> (i32, i32) {
    %c0_i32 = arith.constant 0 : i32
    %c0_i32_0 = arith.constant 0 : i32
    %c0_i32_1 = arith.constant 0 : i32
    return %c0_i32, %c0_i32_0 : i32, i32
  }
  func.func @transform_5(%arg0: i32, %arg1: i32) -> (i32, i32) {
    %c0_i32 = arith.constant 0 : i32
    %c0_i32_0 = arith.constant 0 : i32
    %c0_i32_1 = arith.constant 0 : i32
    return %c0_i32, %c0_i32_0 : i32, i32
  }
  func.func @transform_6(%arg0: i32, %arg1: i32) -> (i32, i32, i32) {
    %c0_i32 = arith.constant 0 : i32
    %c0_i32_0 = arith.constant 0 : i32
    return %arg0, %arg1, %c0_i32 : i32, i32, i32
  }
  func.func @transform_7(%arg0: i32, %arg1: i32) -> (i32, i32, i32) {
    %c0_i32 = arith.constant 0 : i32
    %c0_i32_0 = arith.constant 0 : i32
    return %arg0, %arg1, %c0_i32 : i32, i32, i32
  }
}

</mosaic_0001>

<llo_original>
// kernel: tpu_custom_call.1
$region0: #{tpu_custom_call.1}
  #allocation0 [shape = 'u32[]', space=smem, size = 0x4, offset = 0x4, fixed_abs, tag = 'smem constant byte address 0x4 - core index']
  #allocation1 [shape = 'u32[72,128]{1,0:T(1,128)}', space=vmem, size = 0x9000, scoped, tag = 'internal scratch']
  #allocation2 [shape = 'f32[1,8,32]{2,1,0:T(8,128)}', space=vmem, size = 0x1000, scoped, tag = 'scratch operand']
  #allocation3 [shape = 'f32[1,8,32]{2,1,0:T(8,128)}', space=vmem, size = 0x1000, scoped, tag = 'scratch operand']
  %s0 = inlined_call_operand.hbm [shape: f32[2,8,32], index: 0, kind: input, shape index: {}]
  %s1 = inlined_call_operand.hbm [shape: f32[2,8,32], index: 1, kind: input, shape index: {}]
  %s2 = inlined_call_operand.hbm [shape: f32[32,32], index: 2, kind: input, shape index: {}]
  %s3 = inlined_call_operand.hbm [shape: f32[32,32], index: 3, kind: input, shape index: {}]
  %s4 = inlined_call_operand.hbm [shape: f32[32,32], index: 4, kind: input, shape index: {}]
  %s5 = inlined_call_operand.hbm [shape: f32[32,32], index: 5, kind: input, shape index: {}]
  %s6 = inlined_call_operand.hbm [shape: f32[2,8,32], index: 6, kind: output, shape index: {0}]
  %s7 = inlined_call_operand.hbm [shape: f32[2,8,8], index: 7, kind: output, shape index: {1}]
  %8 = xla_tuple %s6, %s7
  %s9 = sld [smem:[#allocation0]]
  $region93: #{tpu_custom_call.1} parent=0
    _
  %s11 = ssub.s32 1, %s9
  %s12 = scalar_select 0, %s11, %s9
  $region1: #{tpu_custom_call.1} parent=0
    #allocation4 [shape = 'u8[8192]{0}', space=vmem, size = 0x2000, scoped, tag = 'input window, operand 0']
    #allocation5 [shape = 's32[2]{0}', space=sflag, size = 0x8, scoped, tag = 'scoped memory for tpu_custom_call.1']
    #allocation6 [shape = 's32[2]{0}', space=sflag, size = 0x8, scoped, tag = 'scoped memory for tpu_custom_call.1']
    #allocation7 [shape = 'u8[8192]{0}', space=vmem, size = 0x2000, scoped, tag = 'input window, operand 1']
    #allocation8 [shape = 's32[2]{0}', space=sflag, size = 0x8, scoped, tag = 'scoped memory for tpu_custom_call.1']
    #allocation9 [shape = 'u8[16384]{0}', space=vmem, size = 0x4000, scoped, tag = 'input window, operand 2, single buffered']
    #allocation10 [shape = 'u8[16384]{0}', space=vmem, size = 0x4000, scoped, tag = 'input window, operand 3, single buffered']
    #allocation11 [shape = 's32[1]{0}', space=sflag, size = 0x4, scoped, tag = 'scoped memory for tpu_custom_call.1']
    #allocation12 [shape = 'u8[16384]{0}', space=vmem, size = 0x4000, scoped, tag = 'input window, operand 4, single buffered']
    #allocation13 [shape = 'u8[16384]{0}', space=vmem, size = 0x4000, scoped, tag = 'input window, operand 5, single buffered']
    #allocation14 [shape = 's32[1]{0}', space=sflag, size = 0x4, scoped, tag = 'scoped memory for tpu_custom_call.1']
    #allocation15 [shape = 'u8[8192]{0}', space=vmem, size = 0x2000, scoped, tag = 'output window, operand 0']
    #allocation16 [shape = 'u8[8192]{0}', space=vmem, size = 0x2000, scoped, tag = 'output window, operand 1']
    #allocation17 [shape = 's32[2]{0}', space=sflag, size = 0x8, scoped, tag = 'scoped memory for tpu_custom_call.1']
    %13 = vsyncpa [#allocation5], 0
    %s14 = scalar_lea.sflag [#allocation5], 1
    %15 = vsyncpa %s14, 0
    %16 = vsyncpa [#allocation8], 0
    %s17 = scalar_lea.sflag [#allocation8], 1
    %18 = vsyncpa %s17, 0
    %19 = vsyncpa [#allocation11], 0
    %20 = vsyncpa [#allocation14], 0
    %21 = vsyncpa [#allocation6], 0
    %s22 = scalar_lea.sflag [#allocation6], 1
    %23 = vsyncpa %s22, 0
    %24 = vsyncpa [#allocation17], 0
    %s25 = scalar_lea.sflag [#allocation17], 1
    %26 = vsyncpa %s25, 0
    loop: start=0, step=1, limit=4
    $region2: #{tpu_custom_call.1} parent=1 // loop_pre_header
      _
    $region3: #{tpu_custom_call.1} parent=1 // loop_header
      %s28 = sphi 0, %s32
      %p29 = scmp.ge.s32.totalorder %s28, 4
      %s35 = sphi 0, %s47
      %s36 = sphi 0, %s43
      %s37 = sphi 0, %s35
      %s38 = sphi 0, %s36
      %s39 = sphi 0, %s37
      %s40 = sphi 0, %s38
      %s52 = sphi 0, %s54
      %s55 = sphi 0, %s52
      %s56 = sphi 0, %s55
      %s72 = sphi 0, %s56
      %s78 = sphi 0, %s80
      %s81 = sphi 0, %s78
      %s82 = sphi 0, %s81
      %s98 = sphi 0, %s82
      %s102 = sphi 0, %s102
      %s104 = sphi 0, %s102
      %s105 = sphi 0, %s104
      %s119 = sphi 0, %s105
      %s123 = sphi 0, %s123
      %s125 = sphi 0, %s123
      %s126 = sphi 0, %s125
      %s140 = sphi 0, %s126
      %s144 = sphi 0, %s144
      %s146 = sphi 0, %s144
      %s147 = sphi 0, %s146
      %s161 = sphi 0, %s147
      %s165 = sphi 0, %s165
      %s167 = sphi 0, %s165
      %s168 = sphi 0, %s167
      %s182 = sphi 0, %s168
      %s190 = sphi 0, %s192
      %s193 = sphi 0, %s190
      %s194 = sphi 0, %s193
      %s210 = sphi 0, %s194
      %s218 = sphi 0, %s220
      %s221 = sphi 0, %s218
      %s222 = sphi 0, %s221
      %s238 = sphi 0, %s222
    $region4: #{tpu_custom_call.1} parent=1 // loop_header_branch
      %31 = sbr.rel (%p29) target = $region8
    $region5: #{tpu_custom_call.1} parent=1 // loop_body
      %s33 = ssub.s32 %s28, 1
      %s34 = ssub.s32 %s28, 2
      %s41 = sadd.s32 1, %s36
      %p42 = scmp.ge.s32.totalorder %s41, 1
      %s43 = scalar_select %p42, 0, %s41
      %s44 = sadd.s32 1, %s35
      %s45 = scalar_select %p42, %s44, %s35
      %p46 = scmp.ge.s32.totalorder %s45, 2
      %s47 = scalar_select %p46, 0, %s45
      %s48 = ssub.s32 %s35, %s47
      %s49 = ssub.s32 %s36, %s43
      %s50 = sor.u32 %s48, %s49
      %p51 = scmp.eq.s32.totalorder %s50, 0
      %s53 = sadd.s32 %s52, 1
      %s54 = scalar_select %p51, %s52, %s53
      %p57 = pneg %p51
      %p58 = scmp.eq.s32.totalorder %s28, 1
      %p59 = por %p57, %p58
      %p60 = scmp.ne.s32.totalorder %s52, %s55
      %p61 = scmp.eq.s32.totalorder %s28, 0
      %p62 = por %p60, %p61
      %p63 = scmp.ne.s32.totalorder %s52, %s55
      %p64 = scmp.eq.s32.totalorder %s33, 1
      %p65 = por %p63, %p64
      %p66 = scmp.ne.s32.totalorder %s55, %s56
      %p67 = scmp.eq.s32.totalorder %s33, 0
      %p68 = por %p66, %p67
      %p69 = scmp.ne.s32.totalorder %s55, %s56
      %p70 = scmp.eq.s32.totalorder %s34, 1
      %p71 = por %p69, %p70
      %p73 = scmp.ne.s32.totalorder %s56, %s72
      %p74 = scmp.eq.s32.totalorder %s34, 0
      %p75 = por %p73, %p74
      %s76 = ssub.s32 %s35, %s47
      %p77 = scmp.eq.s32.totalorder %s76, 0
      %s79 = sadd.s32 %s78, 1
      %s80 = scalar_select %p77, %s78, %s79
      %p83 = pneg %p77
      %p84 = scmp.eq.s32.totalorder %s28, 1
      %p85 = por %p83, %p84
      %p86 = scmp.ne.s32.totalorder %s78, %s81
      %p87 = scmp.eq.s32.totalorder %s28, 0
      %p88 = por %p86, %p87
      %p89 = scmp.ne.s32.totalorder %s78, %s81
      %p90 = scmp.eq.s32.totalorder %s33, 1
      %p91 = por %p89, %p90
      %p92 = scmp.ne.s32.totalorder %s81, %s82
      %p93 = scmp.eq.s32.totalorder %s33, 0
      %p94 = por %p92, %p93
      %p95 = scmp.ne.s32.totalorder %s81, %s82
      %p96 = scmp.eq.s32.totalorder %s34, 1
      %p97 = por %p95, %p96
      %p99 = scmp.ne.s32.totalorder %s82, %s98
      %p100 = scmp.eq.s32.totalorder %s34, 0
      %p101 = por %p99, %p100
      %s103 = sadd.s32 %s102, 1
      %p106 = scmp.eq.s32.totalorder %s28, 1
      %p107 = scmp.ne.s32.totalorder %s102, %s104
      %p108 = scmp.eq.s32.totalorder %s28, 0
      %p109 = por %p107, %p108
      %p110 = scmp.ne.s32.totalorder %s102, %s104
      %p111 = scmp.eq.s32.totalorder %s33, 1
      %p112 = por %p110, %p111
      %p113 = scmp.ne.s32.totalorder %s104, %s105
      %p114 = scmp.eq.s32.totalorder %s33, 0
      %p115 = por %p113, %p114
      %p116 = scmp.ne.s32.totalorder %s104, %s105
      %p117 = scmp.eq.s32.totalorder %s34, 1
      %p118 = por %p116, %p117
      %p120 = scmp.ne.s32.totalorder %s105, %s119
      %p121 = scmp.eq.s32.totalorder %s34, 0
      %p122 = por %p120, %p121
      %s124 = sadd.s32 %s123, 1
      %p127 = scmp.eq.s32.totalorder %s28, 1
      %p128 = scmp.ne.s32.totalorder %s123, %s125
      %p129 = scmp.eq.s32.totalorder %s28, 0
      %p130 = por %p128, %p129
      %p131 = scmp.ne.s32.totalorder %s123, %s125
      %p132 = scmp.eq.s32.totalorder %s33, 1
      %p133 = por %p131, %p132
      %p134 = scmp.ne.s32.totalorder %s125, %s126
      %p135 = scmp.eq.s32.totalorder %s33, 0
      %p136 = por %p134, %p135
      %p137 = scmp.ne.s32.totalorder %s125, %s126
      %p138 = scmp.eq.s32.totalorder %s34, 1
      %p139 = por %p137, %p138
      %p141 = scmp.ne.s32.totalorder %s126, %s140
      %p142 = scmp.eq.s32.totalorder %s34, 0
      %p143 = por %p141, %p142
      %s145 = sadd.s32 %s144, 1
      %p148 = scmp.eq.s32.totalorder %s28, 1
      %p149 = scmp.ne.s32.totalorder %s144, %s146
      %p150 = scmp.eq.s32.totalorder %s28, 0
      %p151 = por %p149, %p150
      %p152 = scmp.ne.s32.totalorder %s144, %s146
      %p153 = scmp.eq.s32.totalorder %s33, 1
      %p154 = por %p152, %p153
      %p155 = scmp.ne.s32.totalorder %s146, %s147
      %p156 = scmp.eq.s32.totalorder %s33, 0
      %p157 = por %p155, %p156
      %p158 = scmp.ne.s32.totalorder %s146, %s147
      %p159 = scmp.eq.s32.totalorder %s34, 1
      %p160 = por %p158, %p159
      %p162 = scmp.ne.s32.totalorder %s147, %s161
      %p163 = scmp.eq.s32.totalorder %s34, 0
      %p164 = por %p162, %p163
      %s166 = sadd.s32 %s165, 1
      %p169 = scmp.eq.s32.totalorder %s28, 1
      %p170 = scmp.ne.s32.totalorder %s165, %s167
      %p171 = scmp.eq.s32.totalorder %s28, 0
      %p172 = por %p170, %p171
      %p173 = scmp.ne.s32.totalorder %s165, %s167
      %p174 = scmp.eq.s32.totalorder %s33, 1
      %p175 = por %p173, %p174
      %p176 = scmp.ne.s32.totalorder %s167, %s168
      %p177 = scmp.eq.s32.totalorder %s33, 0
      %p178 = por %p176, %p177
      %p179 = scmp.ne.s32.totalorder %s167, %s168
      %p180 = scmp.eq.s32.totalorder %s34, 1
      %p181 = por %p179, %p180
      %p183 = scmp.ne.s32.totalorder %s168, %s182
      %p184 = scmp.eq.s32.totalorder %s34, 0
      %p185 = por %p183, %p184
      %s186 = ssub.s32 %s35, %s47
      %s187 = ssub.s32 %s36, %s43
      %s188 = sor.u32 %s186, %s187
      %p189 = scmp.eq.s32.totalorder %s188, 0
      %s191 = sadd.s32 %s190, 1
      %s192 = scalar_select %p189, %s190, %s191
      %p195 = pneg %p189
      %p196 = scmp.eq.s32.totalorder %s28, 1
      %p197 = por %p195, %p196
      %p198 = scmp.ne.s32.totalorder %s190, %s193
      %p199 = scmp.eq.s32.totalorder %s28, 0
      %p200 = por %p198, %p199
      %p201 = scmp.ne.s32.totalorder %s190, %s193
      %p202 = scmp.eq.s32.totalorder %s33, 1
      %p203 = por %p201, %p202
      %p204 = scmp.ne.s32.totalorder %s193, %s194
      %p205 = scmp.eq.s32.totalorder %s33, 0
      %p206 = por %p204, %p205
      %p207 = scmp.ne.s32.totalorder %s193, %s194
      %p208 = scmp.eq.s32.totalorder %s34, 1
      %p209 = por %p207, %p208
      %p211 = scmp.ne.s32.totalorder %s194, %s210
      %p212 = scmp.eq.s32.totalorder %s34, 0
      %p213 = por %p211, %p212
      %s214 = ssub.s32 %s35, %s47
      %s215 = ssub.s32 %s36, %s43
      %s216 = sor.u32 %s214, %s215
      %p217 = scmp.eq.s32.totalorder %s216, 0
      %s219 = sadd.s32 %s218, 1
      %s220 = scalar_select %p217, %s218, %s219
      %p223 = pneg %p217
      %p224 = scmp.eq.s32.totalorder %s28, 1
      %p225 = por %p223, %p224
      %p226 = scmp.ne.s32.totalorder %s218, %s221
      %p227 = scmp.eq.s32.totalorder %s28, 0
      %p228 = por %p226, %p227
      %p229 = scmp.ne.s32.totalorder %s218, %s221
      %p230 = scmp.eq.s32.totalorder %s33, 1
      %p231 = por %p229, %p230
      %p232 = scmp.ne.s32.totalorder %s221, %s222
      %p233 = scmp.eq.s32.totalorder %s33, 0
      %p234 = por %p232, %p233
      %p235 = scmp.ne.s32.totalorder %s221, %s222
      %p236 = scmp.eq.s32.totalorder %s34, 1
      %p237 = por %p235, %p236
      %p239 = scmp.ne.s32.totalorder %s222, %s238
      %p240 = scmp.eq.s32.totalorder %s34, 0
      %p241 = por %p239, %p240
      %p242 = scmp.le.s32.totalorder 1, %s28
      %p243 = scmp.lt.s32.totalorder %s28, 3
      %p244 = pnand %p242, %p243
      %p245 = pneg %p244
      // Predicated region
      $region9: #{tpu_custom_call.1} parent=5 // pred_check
        _
      $region10: #{tpu_custom_call.1} parent=5 // pred_check_branch
        %247 = sbr.rel (%p244) target = $region12
      $region11: #{tpu_custom_call.1} parent=5 // pred_region
        %s248 = ssub.s32 %s28, 1
        // Predicated region
        $region13: #{tpu_custom_call.1} parent=11 // pred_check
          %p249 = pneg %p115
        $region14: #{tpu_custom_call.1} parent=11 // pred_check_branch
          %251 = sbr.rel (%p249) target = $region16
        $region15: #{tpu_custom_call.1} parent=11 // pred_region
          %253 = vsyncadd [#allocation8], 0
          %s254 = sshll.u32 %s2, 4
          %s255 = int_to_ptr.hbm [resolvable:$true] %s254
          %s256 = sshll.u32 [#allocation9], 4
          %s257 = int_to_ptr.vmem [resolvable:$true] %s256
          %262 = dma.hbm_to_vmem [thread:$0]  %s255, 512, %s257, [#allocation8], 128, 128, 8
        $region16: #{tpu_custom_call.1} parent=11 // pred_fallthru
          _
        // Predicated region
        $region17: #{tpu_custom_call.1} parent=11 // pred_check
          %p263 = pneg %p136
        $region18: #{tpu_custom_call.1} parent=11 // pred_check_branch
          %265 = sbr.rel (%p263) target = $region20
        $region19: #{tpu_custom_call.1} parent=11 // pred_region
          %267 = vsyncadd [#allocation11], 0
          %s268 = sshll.u32 %s3, 4
          %s269 = int_to_ptr.hbm [resolvable:$true] %s268
          %s270 = sshll.u32 [#allocation10], 4
          %s271 = int_to_ptr.vmem [resolvable:$true] %s270
          %276 = dma.hbm_to_vmem [thread:$0]  %s269, 512, %s271, [#allocation11], 128, 128, 8
        $region20: #{tpu_custom_call.1} parent=11 // pred_fallthru
          _
        // Predicated region
        $region21: #{tpu_custom_call.1} parent=11 // pred_check
          %p277 = pneg %p157
        $region22: #{tpu_custom_call.1} parent=11 // pred_check_branch
          %279 = sbr.rel (%p277) target = $region24
        $region23: #{tpu_custom_call.1} parent=11 // pred_region
          %281 = vsyncadd [#allocation11], 0
          %s282 = sshll.u32 %s4, 4
          %s283 = int_to_ptr.hbm [resolvable:$true] %s282
          %s284 = sshll.u32 [#allocation12], 4
          %s285 = int_to_ptr.vmem [resolvable:$true] %s284
          %290 = dma.hbm_to_vmem [thread:$0]  %s283, 512, %s285, [#allocation11], 128, 128, 8
        $region24: #{tpu_custom_call.1} parent=11 // pred_fallthru
          _
        // Predicated region
        $region25: #{tpu_custom_call.1} parent=11 // pred_check
          %p291 = pneg %p178
        $region26: #{tpu_custom_call.1} parent=11 // pred_check_branch
          %293 = sbr.rel (%p291) target = $region28
        $region27: #{tpu_custom_call.1} parent=11 // pred_region
          %295 = vsyncadd [#allocation14], 0
          %s296 = sshll.u32 %s5, 4
          %s297 = int_to_ptr.hbm [resolvable:$true] %s296
          %s298 = sshll.u32 [#allocation13], 4
          %s299 = int_to_ptr.vmem [resolvable:$true] %s298
          %304 = dma.hbm_to_vmem [thread:$0]  %s297, 512, %s299, [#allocation14], 128, 128, 8
        $region28: #{tpu_custom_call.1} parent=11 // pred_fallthru
          _
      $region12: #{tpu_custom_call.1} parent=5 // pred_fallthru
        _
      %p305 = scmp.lt.s32.totalorder %s28, 2
      // Predicated region
      $region29: #{tpu_custom_call.1} parent=5 // pred_check
        %p306 = pneg %p305
      $region30: #{tpu_custom_call.1} parent=5 // pred_check_branch
        %308 = sbr.rel (%p306) target = $region32
      $region31: #{tpu_custom_call.1} parent=5 // pred_region
        // Predicated region
        $region33: #{tpu_custom_call.1} parent=31 // pred_check
          %p309 = pneg %p62
        $region34: #{tpu_custom_call.1} parent=31 // pred_check_branch
          %311 = sbr.rel (%p309) target = $region36
        $region35: #{tpu_custom_call.1} parent=31 // pred_region
          %s312 = sand.u32 %s52, 1
          %s313 = scalar_lea.sflag [#allocation5], %s312
          %s314 = sand.u32 %s52, 1
          %s315 = smul.addr %s314, 8
          %s316 = scalar_lea.vmem [#allocation4], %s315
          %318 = vsyncadd %s313, 0
          %s319 = sadd.s32 %s36, %s35
          %s320 = smul.addr %s319, 8
          %s321 = scalar_lea.hbm %s0, %s320
          %s323 = sshll.u32 %s321, 4
          %s324 = int_to_ptr.hbm [resolvable:$true] %s323
          %s325 = sshll.u32 %s316, 4
          %s326 = int_to_ptr.vmem [resolvable:$true] %s325
          %328 = dma.hbm_to_vmem [thread:$0]  %s324, 128, %s326, %s313
        $region36: #{tpu_custom_call.1} parent=31 // pred_fallthru
          _
        // Predicated region
        $region37: #{tpu_custom_call.1} parent=31 // pred_check
          %p329 = pneg %p88
        $region38: #{tpu_custom_call.1} parent=31 // pred_check_branch
          %331 = sbr.rel (%p329) target = $region40
        $region39: #{tpu_custom_call.1} parent=31 // pred_region
          %s332 = sand.u32 %s28, 1
          %s333 = scalar_lea.sflag [#allocation8], %s332
          %s334 = sand.u32 %s78, 1
          %s335 = smul.addr %s334, 8
          %s336 = scalar_lea.vmem [#allocation7], %s335
          %338 = vsyncadd %s333, 0
          %s339 = smul.addr %s35, 8
          %s340 = scalar_lea.hbm %s1, %s339
          %s342 = sshll.u32 %s340, 4
          %s343 = int_to_ptr.hbm [resolvable:$true] %s342
          %s344 = sshll.u32 %s336, 4
          %s345 = int_to_ptr.vmem [resolvable:$true] %s344
          %347 = dma.hbm_to_vmem [thread:$0]  %s343, 128, %s345, %s333
        $region40: #{tpu_custom_call.1} parent=31 // pred_fallthru
          _
      $region32: #{tpu_custom_call.1} parent=5 // pred_fallthru
        _
      %p348 = scmp.le.s32.totalorder 1, %s28
      %p349 = scmp.lt.s32.totalorder %s28, 3
      %p350 = pnand %p348, %p349
      %p351 = pneg %p350
      // Predicated region
      $region41: #{tpu_custom_call.1} parent=5 // pred_check
        _
      $region42: #{tpu_custom_call.1} parent=5 // pred_check_branch
        %353 = sbr.rel (%p350) target = $region44
      $region43: #{tpu_custom_call.1} parent=5 // pred_region
        %s354 = ssub.s32 %s28, 1
        %s355 = sand.u32 %s55, 1
        %s356 = scalar_lea.sflag [#allocation5], %s355
        %s357 = sand.u32 %s55, 1
        %s358 = smul.addr %s357, 8
        %s359 = scalar_lea.vmem [#allocation4], %s358
        // Predicated region
        $region45: #{tpu_custom_call.1} parent=43 // pred_check
          %p360 = pneg %p68
        $region46: #{tpu_custom_call.1} parent=43 // pred_check_branch
          %362 = sbr.rel (%p360) target = $region48
        $region47: #{tpu_custom_call.1} parent=43 // pred_region
          %364 = dma.done %s356, 128
        $region48: #{tpu_custom_call.1} parent=43 // pred_fallthru
          _
        %s365 = sand.u32 %s33, 1
        %s366 = scalar_lea.sflag [#allocation8], %s365
        %s367 = sand.u32 %s81, 1
        %s368 = smul.addr %s367, 8
        %s369 = scalar_lea.vmem [#allocation7], %s368
        // Predicated region
        $region49: #{tpu_custom_call.1} parent=43 // pred_check
          %p370 = pneg %p94
        $region50: #{tpu_custom_call.1} parent=43 // pred_check_branch
          %372 = sbr.rel (%p370) target = $region52
        $region51: #{tpu_custom_call.1} parent=43 // pred_region
          %374 = dma.done %s366, 128
        $region52: #{tpu_custom_call.1} parent=43 // pred_fallthru
          _
        // Predicated region
        $region53: #{tpu_custom_call.1} parent=43 // pred_check
          %p375 = pneg %p115
        $region54: #{tpu_custom_call.1} parent=43 // pred_check_branch
          %377 = sbr.rel (%p375) target = $region56
        $region55: #{tpu_custom_call.1} parent=43 // pred_region
          %379 = dma.done [#allocation8], 512
        $region56: #{tpu_custom_call.1} parent=43 // pred_fallthru
          _
        // Predicated region
        $region57: #{tpu_custom_call.1} parent=43 // pred_check
          %p380 = pneg %p136
        $region58: #{tpu_custom_call.1} parent=43 // pred_check_branch
          %382 = sbr.rel (%p380) target = $region60
        $region59: #{tpu_custom_call.1} parent=43 // pred_region
          %384 = dma.done [#allocation11], 512
        $region60: #{tpu_custom_call.1} parent=43 // pred_fallthru
          _
        // Predicated region
        $region61: #{tpu_custom_call.1} parent=43 // pred_check
          %p385 = pneg %p157
        $region62: #{tpu_custom_call.1} parent=43 // pred_check_branch
          %387 = sbr.rel (%p385) target = $region64
        $region63: #{tpu_custom_call.1} parent=43 // pred_region
          %389 = dma.done [#allocation11], 512
        $region64: #{tpu_custom_call.1} parent=43 // pred_fallthru
          _
        // Predicated region
        $region65: #{tpu_custom_call.1} parent=43 // pred_check
          %p390 = pneg %p178
        $region66: #{tpu_custom_call.1} parent=43 // pred_check_branch
          %392 = sbr.rel (%p390) target = $region68
        $region67: #{tpu_custom_call.1} parent=43 // pred_region
          %394 = dma.done [#allocation14], 512
        $region68: #{tpu_custom_call.1} parent=43 // pred_fallthru
          _
        %s395 = sand.u32 %s55, 1
        %s396 = scalar_lea.sflag [#allocation5], %s395
        %s397 = sand.u32 %s55, 1
        %s398 = smul.addr %s397, 8
        %s399 = scalar_lea.vmem [#allocation4], %s398
        %p400 = pneg %p68
        %p401 = pneg %p65
        %s402 = sand.u32 %s33, 1
        %s403 = scalar_lea.sflag [#allocation8], %s402
        %s404 = sand.u32 %s81, 1
        %s405 = smul.addr %s404, 8
        %s406 = scalar_lea.vmem [#allocation7], %s405
        %p407 = pneg %p94
        %p408 = pneg %p91
        %p409 = pneg %p115
        %p410 = pneg %p112
        %p411 = pneg %p136
        %p412 = pneg %p133
        %p413 = pneg %p157
        %p414 = pneg %p154
        %p415 = pneg %p178
        %p416 = pneg %p175
        %p417 = pneg %p206
        %p418 = pneg %p203
        %s419 = sand.u32 %s193, 1
        %s420 = scalar_lea.sflag [#allocation6], %s419
        %s421 = sand.u32 %s193, 1
        %s422 = smul.addr %s421, 8
        %s423 = scalar_lea.vmem [#allocation15], %s422
        %p424 = pneg %p234
        %p425 = pneg %p231
        %s426 = sand.u32 %s221, 1
        %s427 = scalar_lea.sflag [#allocation17], %s426
        %s428 = sand.u32 %s221, 1
        %s429 = smul.addr %s428, 8
        %s430 = scalar_lea.vmem [#allocation16], %s429
        %p431 = scmp.eq.s32.totalorder %s38, 0
        // Predicated region
        $region69: #{tpu_custom_call.1} parent=43 // pred_check
          %p432 = pneg %p431
        $region70: #{tpu_custom_call.1} parent=43 // pred_check_branch
          %434 = sbr.rel (%p432) target = $region72
        $region71: #{tpu_custom_call.1} parent=43 // pred_region
          %v435 = vld [vmem:[%s369] sm:$0xff]
          %v436 = vld [vmem:[#allocation10] sm:$0xff]
          %v437 = vld [vmem:[#allocation10 + $0x8] sm:$0xff]
          %v438 = vld [vmem:[#allocation10 + $0x10] sm:$0xff]
          %v439 = vld [vmem:[#allocation10 + $0x18] sm:$0xff]
          %vm440 = vcmask 261120
          %v442 = vsel %vm440, %v435, 0
          %444 = vmatpush.msra.mxu0 0.0
          %445 = vmatpush.msra.mxu0 0.0
          %446 = vmatpush.msra.mxu0 0.0
          %447 = vmatpush.msra.mxu0 0.0
          %448 = vmatpush.msra.mxu0 0.0
          %449 = vmatpush.msra.mxu0 0.0
          %450 = vmatpush.msra.mxu0 0.0
          %451 = vmatpush.msra.mxu0 0.0
          %452 = vmatpush.msra.mxu0 0.0
          %453 = vmatpush.msra.mxu0 0.0
          %454 = vmatpush.msra.mxu0 0.0
          %455 = vmatpush.msra.mxu0 0.0
          %456 = vmatpush.msra.mxu0 %v439
          %457 = vmatpush.msra.mxu0 %v438
          %458 = vmatpush.msra.mxu0 %v437
          %459 = vmatpush.msra.mxu0 %v436
          %460 = vmatmul.f32.gmra.mxu0 %v442
          %v461 = vpop.f32.mrf.mxu0
          %v462 = vadd.f32 0.0, %v461
          %463 = vdwg.mxu0
          %464 = vst.msk [vmem:[#allocation2] sm:$0xff] %vm440, %v462
          %v465 = vld [vmem:[#allocation12] sm:$0xff]
          %v466 = vld [vmem:[#allocation12 + $0x8] sm:$0xff]
          %v467 = vld [vmem:[#allocation12 + $0x10] sm:$0xff]
          %v468 = vld [vmem:[#allocation12 + $0x18] sm:$0xff]
          %469 = vmatpush.msra.mxu0 0.0
          %470 = vmatpush.msra.mxu0 0.0
          %471 = vmatpush.msra.mxu0 0.0
          %472 = vmatpush.msra.mxu0 0.0
          %473 = vmatpush.msra.mxu0 0.0
          %474 = vmatpush.msra.mxu0 0.0
          %475 = vmatpush.msra.mxu0 0.0
          %476 = vmatpush.msra.mxu0 0.0
          %477 = vmatpush.msra.mxu0 0.0
          %478 = vmatpush.msra.mxu0 0.0
          %479 = vmatpush.msra.mxu0 0.0
          %480 = vmatpush.msra.mxu0 0.0
          %481 = vmatpush.msra.mxu0 %v468
          %482 = vmatpush.msra.mxu0 %v467
          %483 = vmatpush.msra.mxu0 %v466
          %484 = vmatpush.msra.mxu0 %v465
          %485 = vmatmul.f32.gmra.mxu0 %v442
          %v486 = vpop.f32.mrf.mxu0
          %v487 = vadd.f32 0.0, %v486
          %488 = vdwg.mxu0
          %489 = vst.msk [vmem:[#allocation3] sm:$0xff] %vm440, %v487
        $region72: #{tpu_custom_call.1} parent=43 // pred_fallthru
          _
        %v490 = vld [vmem:[%s359] sm:$0xff]
        %v491 = vld [vmem:[#allocation9] sm:$0xff]
        %v492 = vld [vmem:[#allocation9 + $0x8] sm:$0xff]
        %v493 = vld [vmem:[#allocation9 + $0x10] sm:$0xff]
        %v494 = vld [vmem:[#allocation9 + $0x18] sm:$0xff]
        %vm495 = vcmask 261120
        %v497 = vsel %vm495, %v490, 0
        %499 = vmatpush.msra.mxu0 0.0
        %500 = vmatpush.msra.mxu0 0.0
        %501 = vmatpush.msra.mxu0 0.0
        %502 = vmatpush.msra.mxu0 0.0
        %503 = vmatpush.msra.mxu0 0.0
        %504 = vmatpush.msra.mxu0 0.0
        %505 = vmatpush.msra.mxu0 0.0
        %506 = vmatpush.msra.mxu0 0.0
        %507 = vmatpush.msra.mxu0 0.0
        %508 = vmatpush.msra.mxu0 0.0
        %509 = vmatpush.msra.mxu0 0.0
        %510 = vmatpush.msra.mxu0 0.0
        %511 = vmatpush.msra.mxu0 %v494
        %512 = vmatpush.msra.mxu0 %v493
        %513 = vmatpush.msra.mxu0 %v492
        %514 = vmatpush.msra.mxu0 %v491
        %515 = vmatmul.f32.gmra.mxu0 %v497
        %v516 = vpop.f32.mrf.mxu0
        %v517 = vadd.f32 0.0, %v516
        %518 = vdwg.mxu0
        %v519 = vld [vmem:[#allocation2] sm:$0xff]
        %v520 = vld [vmem:[#allocation3] sm:$0xff]
        %v522 = vsel %vm495, %v517, 0
        %v525 = vsel %vm495, %v519, 0
        %527 = vmatpush.xpose.msra.mxu0 0.0
        %528 = vmatpush.xpose.msra.mxu0 0.0
        %529 = vmatpush.xpose.msra.mxu0 0.0
        %530 = vmatpush.xpose.msra.mxu0 0.0
        %531 = vmatpush.xpose.msra.mxu0 0.0
        %532 = vmatpush.xpose.msra.mxu0 0.0
        %533 = vmatpush.xpose.msra.mxu0 0.0
        %534 = vmatpush.xpose.msra.mxu0 0.0
        %535 = vmatpush.xpose.msra.mxu0 0.0
        %536 = vmatpush.xpose.msra.mxu0 0.0
        %537 = vmatpush.xpose.msra.mxu0 0.0
        %538 = vmatpush.xpose.msra.mxu0 0.0
        %539 = vmatpush.xpose.msra.mxu0 0.0
        %540 = vmatpush.xpose.msra.mxu0 0.0
        %541 = vmatpush.xpose.msra.mxu0 0.0
        %542 = vmatpush.xpose.msra.mxu0 %v525
        %543 = vmatmul.f32.gmra.mxu0 %v522
        %v544 = vpop.f32.mrf.mxu0
        %v545 = vadd.f32 0.0, %v544
        %546 = vdwg.mxu0
        %vm547 = vcmask 64512
        %v548 = vsel %vm547, %v545, -inf
        %549 = vmax.xlane.f32.xlu0 %v548
        %v550 = vpop.xlane.xlu0 %549
        %v551 = vsub.f32 %v545, %v550
        %v552 = vmul.f32 %v551, 1.442695
        %v553 = vpow.pop %v552
        %v554 = vsel %vm547, %v553, 0.0
        %555 = vadd.xlane.f32.xlu0 %v554
        %v556 = vpop.xlane.xlu0 %555
        %v557 = vrcp.pop %v556
        %v558 = vmul.f32 %v556, %v557
        %v559 = vsub.f32 1.0, %v558
        %v560 = vmul.f32 %v557, %v559
        %v561 = vadd.f32 %v557, %v560
        %vm562 = vweird.f32 %v556
        %vm563 = vweird.f32 %v557
        %vm564 = vmor %vm562, %vm563
        %v565 = vsel %vm564, %v557, %v561
        %v566 = vand.u32 2147483647, %v556
        %vm567 = vcmp.eq.f32.partialorder %v566, 8.507059e+37
        %v568 = vand.u32 %v556, 2147483648
        %v569 = vor.u32 1.1754944e-38, %v568
        %v570 = vsel %vm567, %v569, %v565
        %v571 = vmul.f32 %v553, %v570
        %v573 = vsel %vm547, %v571, 0
        %575 = vmatpush.msra.mxu0 0.0
        %576 = vmatpush.msra.mxu0 0.0
        %577 = vmatpush.msra.mxu0 0.0
        %578 = vmatpush.msra.mxu0 0.0
        %579 = vmatpush.msra.mxu0 0.0
        %580 = vmatpush.msra.mxu0 0.0
        %581 = vmatpush.msra.mxu0 0.0
        %582 = vmatpush.msra.mxu0 0.0
        %583 = vmatpush.msra.mxu0 0.0
        %584 = vmatpush.msra.mxu0 0.0
        %585 = vmatpush.msra.mxu0 0.0
        %586 = vmatpush.msra.mxu0 0.0
        %587 = vmatpush.msra.mxu0 0.0
        %588 = vmatpush.msra.mxu0 0.0
        %589 = vmatpush.msra.mxu0 0.0
        %590 = vmatpush.msra.mxu0 %v520
        %591 = vmatmul.f32.gmra.mxu0 %v573
        %v592 = vpop.f32.mrf.mxu0
        %v593 = vadd.f32 0.0, %v592
        %594 = vdwg.mxu0
        %v595 = vtanh.pop %v593
        %v596 = vld [vmem:[#allocation13] sm:$0xff]
        %v597 = vld [vmem:[#allocation13 + $0x8] sm:$0xff]
        %v598 = vld [vmem:[#allocation13 + $0x10] sm:$0xff]
        %v599 = vld [vmem:[#allocation13 + $0x18] sm:$0xff]
        %v601 = vsel %vm495, %v595, 0
        %603 = vmatpush.msra.mxu0 0.0
        %604 = vmatpush.msra.mxu0 0.0
        %605 = vmatpush.msra.mxu0 0.0
        %606 = vmatpush.msra.mxu0 0.0
        %607 = vmatpush.msra.mxu0 0.0
        %608 = vmatpush.msra.mxu0 0.0
        %609 = vmatpush.msra.mxu0 0.0
        %610 = vmatpush.msra.mxu0 0.0
        %611 = vmatpush.msra.mxu0 0.0
        %612 = vmatpush.msra.mxu0 0.0
        %613 = vmatpush.msra.mxu0 0.0
        %614 = vmatpush.msra.mxu0 0.0
        %615 = vmatpush.msra.mxu0 %v599
        %616 = vmatpush.msra.mxu0 %v598
        %617 = vmatpush.msra.mxu0 %v597
        %618 = vmatpush.msra.mxu0 %v596
        %619 = vmatmul.f32.gmra.mxu0 %v601
        %v620 = vpop.f32.mrf.mxu0
        %v621 = vadd.f32 0.0, %v620
        %622 = vdwg.mxu0
        %623 = vst.msk [vmem:[%s423] sm:$0xff] %vm495, %v621
        %624 = vst.msk [vmem:[%s430] sm:$0xff] %vm547, %v571
        %s625 = sand.u32 %s193, 1
        %s626 = scalar_lea.sflag [#allocation6], %s625
        %s627 = sand.u32 %s193, 1
        %s628 = smul.addr %s627, 8
        %s629 = scalar_lea.vmem [#allocation15], %s628
        %s630 = sand.u32 %s221, 1
        %s631 = scalar_lea.sflag [#allocation17], %s630
        %s632 = sand.u32 %s221, 1
        %s633 = smul.addr %s632, 8
        %s634 = scalar_lea.vmem [#allocation16], %s633
        // Predicated region
        $region73: #{tpu_custom_call.1} parent=43 // pred_check
          %p635 = pneg %p203
        $region74: #{tpu_custom_call.1} parent=43 // pred_check_branch
          %637 = sbr.rel (%p635) target = $region76
        $region75: #{tpu_custom_call.1} parent=43 // pred_region
          %639 = vsyncadd %s626, 0
          %s640 = sadd.s32 %s38, %s37
          %s641 = smul.addr %s640, 8
          %s642 = scalar_lea.hbm %s6, %s641
          %s644 = sshll.u32 %s629, 4
          %s645 = int_to_ptr.vmem [resolvable:$true] %s644
          %s646 = sshll.u32 %s642, 4
          %s647 = int_to_ptr.hbm [resolvable:$true] %s646
          %649 = dma.vmem_to_hbm [thread:$0]  %s645, 128, %s647, %s626
        $region76: #{tpu_custom_call.1} parent=43 // pred_fallthru
          _
        // Predicated region
        $region77: #{tpu_custom_call.1} parent=43 // pred_check
          %p650 = pneg %p231
        $region78: #{tpu_custom_call.1} parent=43 // pred_check_branch
          %652 = sbr.rel (%p650) target = $region80
        $region79: #{tpu_custom_call.1} parent=43 // pred_region
          %654 = vsyncadd %s631, 0
          %s655 = sadd.s32 %s38, %s37
          %s656 = smul.addr %s655, 8
          %s657 = scalar_lea.hbm %s7, %s656
          %s659 = sshll.u32 %s634, 4
          %s660 = int_to_ptr.vmem [resolvable:$true] %s659
          %s661 = sshll.u32 %s657, 4
          %s662 = int_to_ptr.hbm [resolvable:$true] %s661
          %664 = dma.vmem_to_hbm [thread:$0]  %s660, 128, %s662, %s631
        $region80: #{tpu_custom_call.1} parent=43 // pred_fallthru
          _
      $region44: #{tpu_custom_call.1} parent=5 // pred_fallthru
        _
      %p665 = scmp.le.s32.totalorder 2, %s28
      // Predicated region
      $region81: #{tpu_custom_call.1} parent=5 // pred_check
        %p666 = pneg %p665
      $region82: #{tpu_custom_call.1} parent=5 // pred_check_branch
        %668 = sbr.rel (%p666) target = $region84
      $region83: #{tpu_custom_call.1} parent=5 // pred_region
        %s669 = ssub.s32 %s28, 2
        // Predicated region
        $region85: #{tpu_custom_call.1} parent=83 // pred_check
          %p670 = pneg %p209
        $region86: #{tpu_custom_call.1} parent=83 // pred_check_branch
          %672 = sbr.rel (%p670) target = $region88
        $region87: #{tpu_custom_call.1} parent=83 // pred_region
          %s673 = sand.u32 %s194, 1
          %s674 = scalar_lea.sflag [#allocation6], %s673
          %s675 = sand.u32 %s194, 1
          %s676 = smul.addr %s675, 8
          %s677 = scalar_lea.vmem [#allocation15], %s676
          %679 = dma.done %s674, 128
        $region88: #{tpu_custom_call.1} parent=83 // pred_fallthru
          _
        // Predicated region
        $region89: #{tpu_custom_call.1} parent=83 // pred_check
          %p680 = pneg %p237
        $region90: #{tpu_custom_call.1} parent=83 // pred_check_branch
          %682 = sbr.rel (%p680) target = $region92
        $region91: #{tpu_custom_call.1} parent=83 // pred_region
          %s683 = sand.u32 %s222, 1
          %s684 = scalar_lea.sflag [#allocation17], %s683
          %s685 = sand.u32 %s222, 1
          %s686 = smul.addr %s685, 8
          %s687 = scalar_lea.vmem [#allocation16], %s686
          %689 = dma.done %s684, 128
        $region92: #{tpu_custom_call.1} parent=83 // pred_fallthru
          _
      $region84: #{tpu_custom_call.1} parent=5 // pred_fallthru
        _
    $region6: #{tpu_custom_call.1} parent=1 // loop_footer
      %s32 = sadd.s32 1, %s28
    $region7: #{tpu_custom_call.1} parent=1 // loop_footer_branch
      %27 = sbr.rel target = $region3
    $region8: #{tpu_custom_call.1} parent=1 // loop_exit
      _
    %690 = vsyncpa [#allocation5], 1
    %s691 = scalar_lea.sflag [#allocation5], 1
    %692 = vsyncpa %s691, 1
    %693 = vsyncpa [#allocation8], 1
    %s694 = scalar_lea.sflag [#allocation8], 1
    %695 = vsyncpa %s694, 1
    %696 = vsyncpa [#allocation11], 1
    %697 = vsyncpa [#allocation14], 1
    %698 = vsyncpa [#allocation6], 1
    %s699 = scalar_lea.sflag [#allocation6], 1
    %700 = vsyncpa %s699, 1
    %701 = vsyncpa [#allocation17], 1
    %s702 = scalar_lea.sflag [#allocation17], 1
    %703 = vsyncpa %s702, 1

</llo_original>
